<compile_context>
chip_gen: v5e
topology: v5e:2x2
jax: 0.10.0
libtpu: 0.0.40
codegen_flags: <defaults>
</compile_context>

<pallas_src>
import functools
import math

import jax
import jax.numpy as jnp
from jax import lax
from jax.experimental import pallas as pl
from jax.experimental.pallas import tpu as pltpu


def _round_up(x, m):
    return (x + m - 1) // m * m


# --------------------------------------------------------------------------
# In-kernel Gaussian noise (TPU-only path)
# --------------------------------------------------------------------------
def _gaussian(shape, std):
    """N(0, std^2) samples from the on-chip PRNG (prng_seed already called)."""
    if hasattr(pltpu, "stateful_normal"):
        return std * pltpu.stateful_normal(shape, jnp.float32)

    # Fallback: Box-Muller on raw PRNG bits, using BOTH branches (cos and sin)
    # so every uniform pair yields two Gaussians -> half the EUP log/sqrt work.
    def _uniform(s):
        bits = pltpu.prng_random_bits(s)
        if bits.dtype != jnp.int32:
            bits = pltpu.bitcast(bits, jnp.int32)
        # 23 random mantissa bits -> uniform in (0, 1]
        return ((bits & 0x7FFFFF) + 1).astype(jnp.float32) * (1.0 / (1 << 23))

    rows, cols = shape
    if rows % 2 == 0 and rows >= 2:
        h = rows // 2
        u1 = _uniform((h, cols))
        u2 = _uniform((h, cols))
        r = jnp.sqrt(-2.0 * jnp.log(u1))
        t = (2.0 * math.pi) * u2
        return std * jnp.concatenate([r * jnp.cos(t), r * jnp.sin(t)], axis=0)
    u1 = _uniform(shape)
    u2 = _uniform(shape)
    return std * jnp.sqrt(-2.0 * jnp.log(u1)) * jnp.cos((2.0 * math.pi) * u2)


# --------------------------------------------------------------------------
# Kernels
# --------------------------------------------------------------------------
def _linear_tile(x, w_eff, b_eff, out_dtype):
    # x[tb, in_p] . w_eff[tn, in_p] contracted on dim 1 of both -> [tb, tn]
    # (transposed contraction expressed directly; no W_eff.T copy / XLU pass).
    y = lax.dot_general(x, w_eff,
                        dimension_numbers=(((1,), (1,)), ((), ())),
                        preferred_element_type=jnp.float32)
    return (y + b_eff).astype(out_dtype)


def _train_onchip_kernel(seed_ref, x_ref, w_mu_ref, w_sigma_ref,
                         b_mu_ref, b_sigma_ref, o_ref, *, sigma):
    """Training step for one (out_tile j, batch_tile i); noise drawn on-chip."""
    j = pl.program_id(0)
    # Seed depends only on (seed, j): every batch tile of the same out tile
    # re-draws identical noise; tiles get well-separated LCG-mixed seeds.
    pltpu.prng_seed(seed_ref[0] * jnp.int32(1664525)
                    + (j + 1) * jnp.int32(1013904223))
    w_noise = _gaussian(w_mu_ref.shape, sigma)                    # [tn, in_p]
    b_noise = _gaussian((8, b_mu_ref.shape[1]), sigma)[0:1, :]    # [1,  tn]
    w_eff = w_noise * w_sigma_ref[...] + w_mu_ref[...]
    b_eff = b_noise * b_sigma_ref[...] + b_mu_ref[...]
    o_ref[...] = _linear_tile(x_ref[...], w_eff, b_eff, o_ref.dtype)


def _train_noise_in_kernel(x_ref, w_mu_ref, w_sigma_ref, b_mu_ref, b_sigma_ref,
                           w_noise_ref, b_noise_ref, o_ref):
    """Training step, noise streamed in (portable / explicit-noise path)."""
    w_eff = w_noise_ref[...] * w_sigma_ref[...] + w_mu_ref[...]
    b_eff = b_noise_ref[...] * b_sigma_ref[...] + b_mu_ref[...]
    o_ref[...] = _linear_tile(x_ref[...], w_eff, b_eff, o_ref.dtype)


def _eval_kernel(x_ref, w_mu_ref, b_mu_ref, o_ref):
    """Eval fast path: plain linear, touches only w_mu / b_mu."""
    o_ref[...] = _linear_tile(x_ref[...], w_mu_ref[...], b_mu_ref[...],
                              o_ref.dtype)


# --------------------------------------------------------------------------
# Tiling policy
# --------------------------------------------------------------------------
def _pick_tiles(B, in_p, out_p, n_weight_arrays):
    """Choose (tb, tn, B_p): batch tile, out_features tile, padded batch.

    Per-grid-step VMEM footprint (f32, double-buffered blocks):
      weights:  n_weight_arrays * 2 * tn * in_p
      x block:  2 * tb * in_p
      output:   2 * tb * tn
      w_eff:    tn * in_p            (in-kernel temporary)
      biases:   ~8 * tn
    Kept under 24 MiB; CompilerParams raises vmem_limit_bytes to 48 MiB
    (inside v7x's 64 MiB physical VMEM, far under v5e/v6e's 128 MiB).
    """
    budget = 24 << 20

    B8 = _round_up(max(B, 1), 8)
    tb = B8 if B8 <= 256 else 256
    B_p = _round_up(B, tb)

    def footprint(tn, tb_):
        elems = (n_weight_arrays * 2 * tn * in_p + 2 * tb_ * in_p
                 + 2 * tb_ * tn + tn * in_p + 8 * tn)
        return 4 * elems

    # Shrink the batch tile first if even the smallest out tile does not fit.
    while footprint(128, tb) > budget and tb > 8:
        tb = max(8, _round_up(tb // 2, 8))
        B_p = _round_up(B, tb)

    # Largest lane-dense out tile that fits, with >=2 out tiles whenever
    # out_p >= 256 (v7x megacore sharding + weight-DMA/compute overlap).
    tn = 128
    cand = min(out_p, 1024)
    while cand >= 128:
        if (out_p % cand == 0 and footprint(cand, tb) <= budget
                and (out_p // cand >= 2 or out_p <= 128)):
            tn = cand
            break
        cand -= 128
    return tb, tn, B_p


# --------------------------------------------------------------------------
# Parameter preparation (pad ONCE, not every forward)
# --------------------------------------------------------------------------
def prepare_noisy_linear_params(w_mu, w_sigma, b_mu, b_sigma):
    """Zero-pad parameters to lane/sublane-dense shapes a single time."""
    out_f, in_f = w_mu.shape
    in_p = _round_up(in_f, 128)
    out_p = _round_up(out_f, 128)
    pw = ((0, out_p - out_f), (0, in_p - in_f))
    pb = ((0, 0), (0, out_p - out_f))
    return {
        "w_mu": jnp.pad(jnp.asarray(w_mu, jnp.float32), pw),
        "w_sigma": jnp.pad(jnp.asarray(w_sigma, jnp.float32), pw),
        "b_mu": jnp.pad(jnp.asarray(b_mu, jnp.float32).reshape(1, -1), pb),
        "b_sigma": jnp.pad(jnp.asarray(b_sigma, jnp.float32).reshape(1, -1), pb),
        "in_features": in_f,
        "out_features": out_f,
    }


# --------------------------------------------------------------------------
# Forward wrapper
# --------------------------------------------------------------------------
def noisy_linear_forward(x, params, *, sigma=0.5, training=True, seed=0,
                         noise=None, use_onchip_rng=None):
    """Pallas TPU forward for NoisyLinear.

    x:      [B, in_features]
    params: dict from prepare_noisy_linear_params (already padded)
    noise:  optional (w_noise [out,in], b_noise [out]) — use exactly this noise
            (deterministic / debug path). Otherwise fresh N(0, sigma^2) noise is
            drawn per call: on-chip (TPU hardware PRNG, keyed by `seed`) when
            running on TPU, else with jax.random from `seed`.
            NOTE: noise is fully determined by `seed`; change it every step to
            mimic PyTorch's fresh draw per forward.
    returns: [B, out_features]
    """
    in_f, out_f = params["in_features"], params["out_features"]
    out_p, in_p = params["w_mu"].shape
    B = x.shape[0]
    o_dtype = x.dtype

    if use_onchip_rng is None:
        use_onchip_rng = jax.default_backend() == "tpu"
    if noise is not None or not training:
        use_onchip_rng = False

    n_w = 1 if not training else (2 if use_onchip_rng else 3)
    tb, tn, B_p = _pick_tiles(B, in_p, out_p, n_w)
    grid = (out_p // tn, B_p // tb)     # out tiles outer: weights DMA'd once each

    xp = jnp.pad(jnp.asarray(x), ((0, B_p - B), (0, in_p - in_f)))

    cp = pltpu.CompilerParams(dimension_semantics=("parallel", "parallel"),
                              vmem_limit_bytes=48 * 1024 * 1024)

    def specs(with_prefetch):
        if with_prefetch:   # index_maps get the scalar-prefetch ref positionally
            x_s = pl.BlockSpec((tb, in_p), lambda j, i, s: (i, 0))
            w_s = pl.BlockSpec((tn, in_p), lambda j, i, s: (j, 0))
            b_s = pl.BlockSpec((1, tn), lambda j, i, s: (0, j))
            o_s = pl.BlockSpec((tb, tn), lambda j, i, s: (i, j))
        else:
            x_s = pl.BlockSpec((tb, in_p), lambda j, i: (i, 0))
            w_s = pl.BlockSpec((tn, in_p), lambda j, i: (j, 0))
            b_s = pl.BlockSpec((1, tn), lambda j, i: (0, j))
            o_s = pl.BlockSpec((tb, tn), lambda j, i: (i, j))
        return x_s, w_s, b_s, o_s

    out_shape = jax.ShapeDtypeStruct((B_p, out_p), o_dtype)

    if not training:
        x_s, w_s, b_s, o_s = specs(False)
        y_p = pl.pallas_call(
            _eval_kernel,
            out_shape=out_shape,
            grid_spec=pltpu.PrefetchScalarGridSpec(
                num_scalar_prefetch=0, grid=grid,
                in_specs=[x_s, w_s, b_s], out_specs=o_s),
            compiler_params=cp,
        )(xp, params["w_mu"], params["b_mu"])
        return y_p[:B, :out_f]

    if use_onchip_rng:
        x_s, w_s, b_s, o_s = specs(True)
        seed_arr = jnp.asarray([seed], dtype=jnp.int32)
        kernel = functools.partial(_train_onchip_kernel, sigma=float(sigma))
        y_p = pl.pallas_call(
            kernel,
            out_shape=out_shape,
            grid_spec=pltpu.PrefetchScalarGridSpec(
                num_scalar_prefetch=1, grid=grid,
                in_specs=[x_s, w_s, w_s, b_s, b_s], out_specs=o_s),
            compiler_params=cp,
        )(seed_arr, xp, params["w_mu"], params["w_sigma"],
          params["b_mu"], params["b_sigma"])
        return y_p[:B, :out_f]

    # Portable / explicit-noise path: noise generated outside, streamed in.
    if noise is None:
        kw, kb = jax.random.split(jax.random.PRNGKey(seed))
        # Generated directly at padded shape (no extra pad pass); padded rows /
        # cols only ever multiply the zero padding of w_sigma / b_sigma.
        w_noise_p = sigma * jax.random.normal(kw, (out_p, in_p), jnp.float32)
        b_noise_p = sigma * jax.random.normal(kb, (1, out_p), jnp.float32)
    else:
        w_noise, b_noise = noise
        w_noise_p = jnp.pad(jnp.asarray(w_noise, jnp.float32),
                            ((0, out_p - out_f), (0, in_p - in_f)))
        b_noise_p = jnp.pad(jnp.asarray(b_noise, jnp.float32).reshape(1, -1),
                            ((0, 0), (0, out_p - out_f)))

    x_s, w_s, b_s, o_s = specs(False)
    y_p = pl.pallas_call(
        _train_noise_in_kernel,
        out_shape=out_shape,
        grid_spec=pltpu.PrefetchScalarGridSpec(
            num_scalar_prefetch=0, grid=grid,
            in_specs=[x_s, w_s, w_s, b_s, b_s, w_s, b_s], out_specs=o_s),
        compiler_params=cp,
    )(xp, params["w_mu"], params["w_sigma"], params["b_mu"], params["b_sigma"],
      w_noise_p, b_noise_p)
    return y_p[:B, :out_f]


def init_noisy_linear_params(key, in_features, out_features):
    """Matches the PyTorch __init__: kaiming_uniform_(a=sqrt(5)) for w_mu/w_sigma
    => U(-1/sqrt(fan_in), 1/sqrt(fan_in)); zeros for b_mu/b_sigma."""
    k_mu, k_sigma = jax.random.split(key)
    bound = 1.0 / math.sqrt(in_features)
    w_mu = jax.random.uniform(k_mu, (out_features, in_features),
                              jnp.float32, -bound, bound)
    w_sigma = jax.random.uniform(k_sigma, (out_features, in_features),
                                 jnp.float32, -bound, bound)
    b_mu = jnp.zeros((out_features,), jnp.float32)
    b_sigma = jnp.zeros((out_features,), jnp.float32)
    return w_mu, w_sigma, b_mu, b_sigma


if __name__ == "__main__":
    key = jax.random.PRNGKey(0)
    k_param, k_x, k_bm, k_bs, k_n = jax.random.split(key, 5)

    B, in_features, out_features = 8, 32, 64
    sigma = 0.5  # forward's noise std (torch.normal(0, sigma, ...))

    w_mu, w_sigma, b_mu, b_sigma = init_noisy_linear_params(
        k_param, in_features, out_features)
    # The module zero-inits the bias params; perturb them so the bias-noise
    # path is actually exercised by the checks below.
    b_mu = 0.1 * jax.random.normal(k_bm, (out_features,), jnp.float32)
    b_sigma = 0.05 * jax.random.normal(k_bs, (out_features,), jnp.float32)

    params = prepare_noisy_linear_params(w_mu, w_sigma, b_mu, b_sigma)  # pad ONCE
    x = jax.random.normal(k_x, (B, in_features), jnp.float32)

    # --- training, fresh noise (on-chip PRNG on TPU, jax.random elsewhere) ---
    y_train = noisy_linear_forward(x, params, sigma=sigma, training=True,
                                   seed=1234)
    y_train = jax.block_until_ready(y_train)
    assert y_train.shape == (B, out_features)
    assert bool(jnp.all(jnp.isfinite(y_train))), "non-finite training output"

    # --- training, explicit noise: exact check vs a pure-JAX reference -------
    kw, kb = jax.random.split(k_n)
    w_noise = sigma * jax.random.normal(kw, (out_features, in_features),
                                        jnp.float32)
    b_noise = sigma * jax.random.normal(kb, (out_features,), jnp.float32)
    y_dbg = noisy_linear_forward(x, params, sigma=sigma, training=True,
                                 noise=(w_noise, b_noise))
    y_dbg = jax.block_until_ready(y_dbg)
    y_ref = x @ (w_noise * w_sigma + w_mu).T + (b_noise * b_sigma + b_mu)
    assert jnp.allclose(y_dbg, y_ref, atol=1e-4, rtol=1e-4), "train mismatch"

    # --- eval mode: plain linear on w_mu / b_mu only --------------------------
    y_eval = noisy_linear_forward(x, params, training=False)
    y_eval = jax.block_until_ready(y_eval)
    assert jnp.allclose(y_eval, x @ w_mu.T + b_mu,
                        atol=1e-5, rtol=1e-5), "eval mismatch"

    print("KERNEL_OK")
</pallas_src>

<mosaic_0001>
module attributes {stable_mosaic.version = 11 : i64} {
  func.func @_train_noise_in_kernel(%arg0: i32, %arg1: i32, %arg2: memref<8x128xf32, #tpu.memory_space<vmem>>, %arg3: memref<128x128xf32, #tpu.memory_space<vmem>>, %arg4: memref<128x128xf32, #tpu.memory_space<vmem>>, %arg5: memref<1x128xf32, #tpu.memory_space<vmem>>, %arg6: memref<1x128xf32, #tpu.memory_space<vmem>>, %arg7: memref<128x128xf32, #tpu.memory_space<vmem>>, %arg8: memref<1x128xf32, #tpu.memory_space<vmem>>, %arg9: memref<8x128xf32, #tpu.memory_space<vmem>>) attributes {dimension_semantics = [#tpu.dimension_semantics<parallel>, #tpu.dimension_semantics<parallel>], iteration_bounds = array<i64: 1, 1>, scalar_prefetch = 0 : i64, scratch_operands = 0 : i64, tpu.core_type = #tpu.core_type<tc>, window_params = [{transform_indices = @transform_0, window_bounds = array<i64: 8, 128>}, {transform_indices = @transform_1, window_bounds = array<i64: 128, 128>}, {transform_indices = @transform_2, window_bounds = array<i64: 128, 128>}, {transform_indices = @transform_3, window_bounds = array<i64: 1, 128>}, {transform_indices = @transform_4, window_bounds = array<i64: 1, 128>}, {transform_indices = @transform_5, window_bounds = array<i64: 128, 128>}, {transform_indices = @transform_6, window_bounds = array<i64: 1, 128>}, {transform_indices = @transform_7, window_bounds = array<i64: 8, 128>}]} {
    %c0 = arith.constant 0 : index
    %c0_0 = arith.constant 0 : index
    %0 = vector.load %arg7[%c0, %c0_0] : memref<128x128xf32, #tpu.memory_space<vmem>>, vector<128x128xf32>
    %c0_1 = arith.constant 0 : index
    %c0_2 = arith.constant 0 : index
    %1 = vector.load %arg4[%c0_1, %c0_2] : memref<128x128xf32, #tpu.memory_space<vmem>>, vector<128x128xf32>
    %2 = arith.mulf %0, %1 : vector<128x128xf32>
    %c0_3 = arith.constant 0 : index
    %c0_4 = arith.constant 0 : index
    %3 = vector.load %arg3[%c0_3, %c0_4] : memref<128x128xf32, #tpu.memory_space<vmem>>, vector<128x128xf32>
    %4 = arith.addf %2, %3 : vector<128x128xf32>
    %c0_5 = arith.constant 0 : index
    %c0_6 = arith.constant 0 : index
    %5 = vector.load %arg8[%c0_5, %c0_6] : memref<1x128xf32, #tpu.memory_space<vmem>>, vector<1x128xf32>
    %c0_7 = arith.constant 0 : index
    %c0_8 = arith.constant 0 : index
    %6 = vector.load %arg6[%c0_7, %c0_8] : memref<1x128xf32, #tpu.memory_space<vmem>>, vector<1x128xf32>
    %7 = arith.mulf %5, %6 : vector<1x128xf32>
    %c0_9 = arith.constant 0 : index
    %c0_10 = arith.constant 0 : index
    %8 = vector.load %arg5[%c0_9, %c0_10] : memref<1x128xf32, #tpu.memory_space<vmem>>, vector<1x128xf32>
    %9 = arith.addf %7, %8 : vector<1x128xf32>
    %c0_11 = arith.constant 0 : index
    %c0_12 = arith.constant 0 : index
    %10 = vector.load %arg2[%c0_11, %c0_12] : memref<8x128xf32, #tpu.memory_space<vmem>>, vector<8x128xf32>
    %cst = arith.constant dense<0.000000e+00> : vector<8x128xf32>
    %11 = tpu.matmul %10, %4, %cst {dimension_numbers = #tpu.dot_dimension_numbers<[1], [1], [0], [0], [0, 0, 1, 0], [], []>} : vector<8x128xf32>, vector<128x128xf32>, vector<8x128xf32> -> vector<8x128xf32>
    %12 = vector.broadcast %9 : vector<1x128xf32> to vector<8x128xf32>
    %13 = arith.addf %11, %12 : vector<8x128xf32>
    %c0_13 = arith.constant 0 : index
    %c0_14 = arith.constant 0 : index
    %14 = vector.load %arg9[%c0_13, %c0_14] : memref<8x128xf32, #tpu.memory_space<vmem>>, vector<8x128xf32>
    tpu.vector_store %arg9[%c0_13, %c0_14], %13 {strides = array<i32>} : memref<8x128xf32, #tpu.memory_space<vmem>>, vector<8x128xf32>,
    return
  }
  func.func @transform_0(%arg0: i32, %arg1: i32) -> (i32, i32) {
    %c0_i32 = arith.constant 0 : i32
    %c0_i32_0 = arith.constant 0 : i32
    return %arg1, %c0_i32 : i32, i32
  }
  func.func @transform_1(%arg0: i32, %arg1: i32) -> (i32, i32) {
    %c0_i32 = arith.constant 0 : i32
    %c0_i32_0 = arith.constant 0 : i32
    return %arg0, %c0_i32 : i32, i32
  }
  func.func @transform_2(%arg0: i32, %arg1: i32) -> (i32, i32) {
    %c0_i32 = arith.constant 0 : i32
    %c0_i32_0 = arith.constant 0 : i32
    return %arg0, %c0_i32 : i32, i32
  }
  func.func @transform_3(%arg0: i32, %arg1: i32) -> (i32, i32) {
    %c0_i32 = arith.constant 0 : i32
    %c0_i32_0 = arith.constant 0 : i32
    return %c0_i32, %arg0 : i32, i32
  }
  func.func @transform_4(%arg0: i32, %arg1: i32) -> (i32, i32) {
    %c0_i32 = arith.constant 0 : i32
    %c0_i32_0 = arith.constant 0 : i32
    return %c0_i32, %arg0 : i32, i32
  }
  func.func @transform_5(%arg0: i32, %arg1: i32) -> (i32, i32) {
    %c0_i32 = arith.constant 0 : i32
    %c0_i32_0 = arith.constant 0 : i32
    return %arg0, %c0_i32 : i32, i32
  }
  func.func @transform_6(%arg0: i32, %arg1: i32) -> (i32, i32) {
    %c0_i32 = arith.constant 0 : i32
    %c0_i32_0 = arith.constant 0 : i32
    return %c0_i32, %arg0 : i32, i32
  }
  func.func @transform_7(%arg0: i32, %arg1: i32) -> (i32, i32) {
    %c0_i32 = arith.constant 0 : i32
    return %arg1, %arg0 : i32, i32
  }
}

</mosaic_0001>

<llo_original>
// kernel: tpu_custom_call.1
$region0: #{tpu_custom_call.1}
  #allocation0 [shape = 'u32[]', space=smem, size = 0x4, offset = 0x4, fixed_abs, tag = 'smem constant byte address 0x4 - core index']
  #allocation1 [shape = 'u32[72,128]{1,0:T(1,128)}', space=vmem, size = 0x9000, scoped, tag = 'internal scratch']
  %s0 = inlined_call_operand.hbm [shape: f32[8,128], index: 0, kind: input, shape index: {}]
  %s1 = inlined_call_operand.hbm [shape: f32[128,128], index: 1, kind: input, shape index: {}]
  %s2 = inlined_call_operand.hbm [shape: f32[128,128], index: 2, kind: input, shape index: {}]
  %s3 = inlined_call_operand.vmem [shape: f32[1,128], index: 3, kind: input, shape index: {}]
  %s4 = inlined_call_operand.vmem [shape: f32[1,128], index: 4, kind: input, shape index: {}]
  %s5 = inlined_call_operand.hbm [shape: f32[128,128], index: 5, kind: input, shape index: {}]
  %s6 = inlined_call_operand.vmem [shape: f32[1,128], index: 6, kind: input, shape index: {}]
  %s7 = inlined_call_operand.hbm [shape: f32[8,128], index: 7, kind: output, shape index: {}]
  %s8 = sld [smem:[#allocation0]]
  $region54: #{tpu_custom_call.1} parent=0
    _
  %s10 = ssub.s32 1, %s8
  %s11 = scalar_select 0, %s10, %s8
  $region1: #{tpu_custom_call.1} parent=0
    #allocation2 [shape = 'u8[4096]{0}', space=vmem, size = 0x1000, scoped, tag = 'input window, operand 0, single buffered']
    #allocation3 [shape = 's32[1]{0}', space=sflag, size = 0x4, scoped, tag = 'scoped memory for tpu_custom_call.1']
    #allocation4 [shape = 's32[1]{0}', space=sflag, size = 0x4, scoped, tag = 'scoped memory for tpu_custom_call.1']
    #allocation5 [shape = 'u8[65536]{0}', space=vmem, size = 0x10000, scoped, tag = 'input window, operand 1, single buffered']
    #allocation6 [shape = 's32[1]{0}', space=sflag, size = 0x4, scoped, tag = 'scoped memory for tpu_custom_call.1']
    #allocation7 [shape = 'u8[65536]{0}', space=vmem, size = 0x10000, scoped, tag = 'input window, operand 2, single buffered']
    #allocation8 [shape = 'u8[65536]{0}', space=vmem, size = 0x10000, scoped, tag = 'input window, operand 5, single buffered']
    #allocation9 [shape = 's32[1]{0}', space=sflag, size = 0x4, scoped, tag = 'scoped memory for tpu_custom_call.1']
    #allocation10 [shape = 'u8[4096]{0}', space=vmem, size = 0x1000, scoped, tag = 'output window, operand 0, single buffered']
    %12 = vsyncpa [#allocation3], 0
    %13 = vsyncpa [#allocation6], 0
    %14 = vsyncpa [#allocation9], 0
    %15 = vsyncpa [#allocation4], 0
    // Predicated region
    $region2: #{tpu_custom_call.1} parent=1 // pred_check
      _
    $region3: #{tpu_custom_call.1} parent=1 // pred_check_branch
      %17 = sbr.rel (0) target = $region5
    $region4: #{tpu_custom_call.1} parent=1 // pred_region
      %19 = vsyncadd [#allocation3], 0
      %s21 = sshll.u32 %s0, 4
      %s22 = int_to_ptr.hbm [resolvable:$true] %s21
      %s23 = sshll.u32 [#allocation2], 4
      %s24 = int_to_ptr.vmem [resolvable:$true] %s23
      %26 = dma.hbm_to_vmem [thread:$0]  %s22, 128, %s24, [#allocation3]
    $region5: #{tpu_custom_call.1} parent=1 // pred_fallthru
      _
    // Predicated region
    $region6: #{tpu_custom_call.1} parent=1 // pred_check
      _
    $region7: #{tpu_custom_call.1} parent=1 // pred_check_branch
      %28 = sbr.rel (0) target = $region9
    $region8: #{tpu_custom_call.1} parent=1 // pred_region
      %30 = vsyncadd [#allocation6], 0
      %s31 = sshll.u32 %s1, 4
      %s32 = int_to_ptr.hbm [resolvable:$true] %s31
      %s33 = sshll.u32 [#allocation5], 4
      %s34 = int_to_ptr.vmem [resolvable:$true] %s33
      %39 = dma.hbm_to_vmem [thread:$0]  %s32, 2048, %s34, [#allocation6], 128, 128, 8
    $region9: #{tpu_custom_call.1} parent=1 // pred_fallthru
      _
    // Predicated region
    $region10: #{tpu_custom_call.1} parent=1 // pred_check
      _
    $region11: #{tpu_custom_call.1} parent=1 // pred_check_branch
      %41 = sbr.rel (0) target = $region13
    $region12: #{tpu_custom_call.1} parent=1 // pred_region
      %43 = vsyncadd [#allocation6], 0
      %s44 = sshll.u32 %s2, 4
      %s45 = int_to_ptr.hbm [resolvable:$true] %s44
      %s46 = sshll.u32 [#allocation7], 4
      %s47 = int_to_ptr.vmem [resolvable:$true] %s46
      %52 = dma.hbm_to_vmem [thread:$0]  %s45, 2048, %s47, [#allocation6], 128, 128, 8
    $region13: #{tpu_custom_call.1} parent=1 // pred_fallthru
      _
    // Predicated region
    $region14: #{tpu_custom_call.1} parent=1 // pred_check
      _
    $region15: #{tpu_custom_call.1} parent=1 // pred_check_branch
      %54 = sbr.rel (0) target = $region17
    $region16: #{tpu_custom_call.1} parent=1 // pred_region
      _
    $region17: #{tpu_custom_call.1} parent=1 // pred_fallthru
      _
    // Predicated region
    $region18: #{tpu_custom_call.1} parent=1 // pred_check
      _
    $region19: #{tpu_custom_call.1} parent=1 // pred_check_branch
      %56 = sbr.rel (0) target = $region21
    $region20: #{tpu_custom_call.1} parent=1 // pred_region
      _
    $region21: #{tpu_custom_call.1} parent=1 // pred_fallthru
      _
    // Predicated region
    $region22: #{tpu_custom_call.1} parent=1 // pred_check
      _
    $region23: #{tpu_custom_call.1} parent=1 // pred_check_branch
      %58 = sbr.rel (0) target = $region25
    $region24: #{tpu_custom_call.1} parent=1 // pred_region
      %60 = vsyncadd [#allocation9], 0
      %s61 = sshll.u32 %s5, 4
      %s62 = int_to_ptr.hbm [resolvable:$true] %s61
      %s63 = sshll.u32 [#allocation8], 4
      %s64 = int_to_ptr.vmem [resolvable:$true] %s63
      %69 = dma.hbm_to_vmem [thread:$0]  %s62, 2048, %s64, [#allocation9], 128, 128, 8
    $region25: #{tpu_custom_call.1} parent=1 // pred_fallthru
      _
    // Predicated region
    $region26: #{tpu_custom_call.1} parent=1 // pred_check
      _
    $region27: #{tpu_custom_call.1} parent=1 // pred_check_branch
      %71 = sbr.rel (0) target = $region29
    $region28: #{tpu_custom_call.1} parent=1 // pred_region
      _
    $region29: #{tpu_custom_call.1} parent=1 // pred_fallthru
      _
    // Predicated region
    $region30: #{tpu_custom_call.1} parent=1 // pred_check
      _
    $region31: #{tpu_custom_call.1} parent=1 // pred_check_branch
      %73 = sbr.rel (0) target = $region33
    $region32: #{tpu_custom_call.1} parent=1 // pred_region
      %75 = dma.done [#allocation3], 128
    $region33: #{tpu_custom_call.1} parent=1 // pred_fallthru
      _
    // Predicated region
    $region34: #{tpu_custom_call.1} parent=1 // pred_check
      _
    $region35: #{tpu_custom_call.1} parent=1 // pred_check_branch
      %77 = sbr.rel (0) target = $region37
    $region36: #{tpu_custom_call.1} parent=1 // pred_region
      %79 = dma.done [#allocation6], 2048
    $region37: #{tpu_custom_call.1} parent=1 // pred_fallthru
      _
    // Predicated region
    $region38: #{tpu_custom_call.1} parent=1 // pred_check
      _
    $region39: #{tpu_custom_call.1} parent=1 // pred_check_branch
      %81 = sbr.rel (0) target = $region41
    $region40: #{tpu_custom_call.1} parent=1 // pred_region
      %83 = dma.done [#allocation6], 2048
    $region41: #{tpu_custom_call.1} parent=1 // pred_fallthru
      _
    // Predicated region
    $region42: #{tpu_custom_call.1} parent=1 // pred_check
      _
    $region43: #{tpu_custom_call.1} parent=1 // pred_check_branch
      %85 = sbr.rel (0) target = $region45
    $region44: #{tpu_custom_call.1} parent=1 // pred_region
      %87 = dma.done [#allocation9], 2048
    $region45: #{tpu_custom_call.1} parent=1 // pred_fallthru
      _
    %v88 = vld [vmem:[#allocation8] sm:$0xff]
    %v89 = vld [vmem:[#allocation8 + $0x8] sm:$0xff]
    %v90 = vld [vmem:[#allocation8 + $0x10] sm:$0xff]
    %v91 = vld [vmem:[#allocation8 + $0x18] sm:$0xff]
    %v92 = vld [vmem:[#allocation8 + $0x20] sm:$0xff]
    %v93 = vld [vmem:[#allocation8 + $0x28] sm:$0xff]
    %v94 = vld [vmem:[#allocation8 + $0x30] sm:$0xff]
    %v95 = vld [vmem:[#allocation8 + $0x38] sm:$0xff]
    %v96 = vld [vmem:[#allocation8 + $0x40] sm:$0xff]
    %v97 = vld [vmem:[#allocation8 + $0x48] sm:$0xff]
    %v98 = vld [vmem:[#allocation8 + $0x50] sm:$0xff]
    %v99 = vld [vmem:[#allocation8 + $0x58] sm:$0xff]
    %v100 = vld [vmem:[#allocation8 + $0x60] sm:$0xff]
    %v101 = vld [vmem:[#allocation8 + $0x68] sm:$0xff]
    %v102 = vld [vmem:[#allocation8 + $0x70] sm:$0xff]
    %v103 = vld [vmem:[#allocation8 + $0x78] sm:$0xff]
    %v104 = vld [vmem:[#allocation7] sm:$0xff]
    %v105 = vld [vmem:[#allocation7 + $0x8] sm:$0xff]
    %v106 = vld [vmem:[#allocation7 + $0x10] sm:$0xff]
    %v107 = vld [vmem:[#allocation7 + $0x18] sm:$0xff]
    %v108 = vld [vmem:[#allocation7 + $0x20] sm:$0xff]
    %v109 = vld [vmem:[#allocation7 + $0x28] sm:$0xff]
    %v110 = vld [vmem:[#allocation7 + $0x30] sm:$0xff]
    %v111 = vld [vmem:[#allocation7 + $0x38] sm:$0xff]
    %v112 = vld [vmem:[#allocation7 + $0x40] sm:$0xff]
    %v113 = vld [vmem:[#allocation7 + $0x48] sm:$0xff]
    %v114 = vld [vmem:[#allocation7 + $0x50] sm:$0xff]
    %v115 = vld [vmem:[#allocation7 + $0x58] sm:$0xff]
    %v116 = vld [vmem:[#allocation7 + $0x60] sm:$0xff]
    %v117 = vld [vmem:[#allocation7 + $0x68] sm:$0xff]
    %v118 = vld [vmem:[#allocation7 + $0x70] sm:$0xff]
    %v119 = vld [vmem:[#allocation7 + $0x78] sm:$0xff]
    %v120 = vmul.f32 %v88, %v104
    %v121 = vmul.f32 %v89, %v105
    %v122 = vmul.f32 %v90, %v106
    %v123 = vmul.f32 %v91, %v107
    %v124 = vmul.f32 %v92, %v108
    %v125 = vmul.f32 %v93, %v109
    %v126 = vmul.f32 %v94, %v110
    %v127 = vmul.f32 %v95, %v111
    %v128 = vmul.f32 %v96, %v112
    %v129 = vmul.f32 %v97, %v113
    %v130 = vmul.f32 %v98, %v114
    %v131 = vmul.f32 %v99, %v115
    %v132 = vmul.f32 %v100, %v116
    %v133 = vmul.f32 %v101, %v117
    %v134 = vmul.f32 %v102, %v118
    %v135 = vmul.f32 %v103, %v119
    %v136 = vld [vmem:[#allocation5] sm:$0xff]
    %v137 = vld [vmem:[#allocation5 + $0x8] sm:$0xff]
    %v138 = vld [vmem:[#allocation5 + $0x10] sm:$0xff]
    %v139 = vld [vmem:[#allocation5 + $0x18] sm:$0xff]
    %v140 = vld [vmem:[#allocation5 + $0x20] sm:$0xff]
    %v141 = vld [vmem:[#allocation5 + $0x28] sm:$0xff]
    %v142 = vld [vmem:[#allocation5 + $0x30] sm:$0xff]
    %v143 = vld [vmem:[#allocation5 + $0x38] sm:$0xff]
    %v144 = vld [vmem:[#allocation5 + $0x40] sm:$0xff]
    %v145 = vld [vmem:[#allocation5 + $0x48] sm:$0xff]
    %v146 = vld [vmem:[#allocation5 + $0x50] sm:$0xff]
    %v147 = vld [vmem:[#allocation5 + $0x58] sm:$0xff]
    %v148 = vld [vmem:[#allocation5 + $0x60] sm:$0xff]
    %v149 = vld [vmem:[#allocation5 + $0x68] sm:$0xff]
    %v150 = vld [vmem:[#allocation5 + $0x70] sm:$0xff]
    %v151 = vld [vmem:[#allocation5 + $0x78] sm:$0xff]
    %v152 = vadd.f32 %v120, %v136
    %v153 = vadd.f32 %v121, %v137
    %v154 = vadd.f32 %v122, %v138
    %v155 = vadd.f32 %v123, %v139
    %v156 = vadd.f32 %v124, %v140
    %v157 = vadd.f32 %v125, %v141
    %v158 = vadd.f32 %v126, %v142
    %v159 = vadd.f32 %v127, %v143
    %v160 = vadd.f32 %v128, %v144
    %v161 = vadd.f32 %v129, %v145
    %v162 = vadd.f32 %v130, %v146
    %v163 = vadd.f32 %v131, %v147
    %v164 = vadd.f32 %v132, %v148
    %v165 = vadd.f32 %v133, %v149
    %v166 = vadd.f32 %v134, %v150
    %v167 = vadd.f32 %v135, %v151
    %v168 = vld [vmem:[%s6] sm:$0x1]
    %v169 = vld [vmem:[%s4] sm:$0x1]
    %v170 = vmul.f32 %v168, %v169
    %v171 = vld [vmem:[%s3] sm:$0x1]
    %v172 = vadd.f32 %v170, %v171
    %v173 = vld [vmem:[#allocation2] sm:$0xff]
    %v175 = vperm.slane %v172, 0
    %177 = vmatpush.xpose.msra.mxu0 %v167
    %178 = vmatpush.xpose.msra.mxu0 %v166
    %179 = vmatpush.xpose.msra.mxu0 %v165
    %180 = vmatpush.xpose.msra.mxu0 %v164
    %181 = vmatpush.xpose.msra.mxu0 %v163
    %182 = vmatpush.xpose.msra.mxu0 %v162
    %183 = vmatpush.xpose.msra.mxu0 %v161
    %184 = vmatpush.xpose.msra.mxu0 %v160
    %185 = vmatpush.xpose.msra.mxu0 %v159
    %186 = vmatpush.xpose.msra.mxu0 %v158
    %187 = vmatpush.xpose.msra.mxu0 %v157
    %188 = vmatpush.xpose.msra.mxu0 %v156
    %189 = vmatpush.xpose.msra.mxu0 %v155
    %190 = vmatpush.xpose.msra.mxu0 %v154
    %191 = vmatpush.xpose.msra.mxu0 %v153
    %192 = vmatpush.xpose.msra.mxu0 %v152
    %193 = vmatmul.f32.gmra.mxu0 %v173
    %v194 = vpop.f32.mrf.mxu0
    %v195 = vadd.f32 %v175, %v194
    %196 = vdwg.mxu0
    %197 = vst [vmem:[#allocation10] sm:$0xff] %v195
    // Predicated region
    $region46: #{tpu_custom_call.1} parent=1 // pred_check
      _
    $region47: #{tpu_custom_call.1} parent=1 // pred_check_branch
      %199 = sbr.rel (0) target = $region49
    $region48: #{tpu_custom_call.1} parent=1 // pred_region
      %201 = vsyncadd [#allocation4], 0
      %s203 = sshll.u32 [#allocation10], 4
      %s204 = int_to_ptr.vmem [resolvable:$true] %s203
      %s205 = sshll.u32 %s7, 4
      %s206 = int_to_ptr.hbm [resolvable:$true] %s205
      %208 = dma.vmem_to_hbm [thread:$0]  %s204, 128, %s206, [#allocation4]
    $region49: #{tpu_custom_call.1} parent=1 // pred_fallthru
      _
    // Predicated region
    $region50: #{tpu_custom_call.1} parent=1 // pred_check
      _
    $region51: #{tpu_custom_call.1} parent=1 // pred_check_branch
      %210 = sbr.rel (0) target = $region53
    $region52: #{tpu_custom_call.1} parent=1 // pred_region
      %212 = dma.done [#allocation4], 128
    $region53: #{tpu_custom_call.1} parent=1 // pred_fallthru
      _
    %213 = vsyncpa [#allocation3], 1
    %214 = vsyncpa [#allocation6], 1
    %215 = vsyncpa [#allocation9], 1
    %216 = vsyncpa [#allocation4], 1

</llo_original>
